<compile_context>
chip_gen: v6e
topology: v6e:2x2x1
jax: 0.10.0
libtpu: 0.0.40
codegen_flags: <defaults>
</compile_context>

<pallas_src>
import jax
import jax.numpy as jnp
from jax.experimental import pallas as pl
from jax.experimental.pallas import tpu as pltpu


def _v_min_kernel(x_ref, w_ref, p_ref, o_ref):
    # x_ref: (N_src, tile_f)   source-node features, features on lanes
    # w_ref: (N_src, N_dst, 1) edge weights  w[i, j]
    # p_ref: (N_src, N_dst, 1) 0.0 where edge (i->j) exists, +inf otherwise
    # o_ref: (N_dst, tile_f)   aggregated output
    n_src = x_ref.shape[0]
    n_dst, tile_f = o_ref.shape

    init = jnp.full((n_dst, tile_f), jnp.inf, dtype=jnp.float32)

    def body(i, acc):
        x_i = x_ref[pl.ds(i, 1), :].astype(jnp.float32)   # (1, tile_f)   lane vector
        w_i = w_ref[i].astype(jnp.float32)                # (n_dst, 1)    sublane vector
        p_i = p_ref[i]                                    # (n_dst, 1)
        # broadcast outer product + additive mask, then running elementwise min
        return jnp.minimum(acc, x_i * w_i + p_i)          # (n_dst, tile_f)

    unroll = True if n_src <= 32 else 8
    acc = jax.lax.fori_loop(0, n_src, body, init, unroll=unroll)
    o_ref[...] = acc.astype(o_ref.dtype)


def v_min_forward(V, adj_w, adj_mask, V_in=None, adp=None, *, max_tile_f=512):
    """V: (B, C, N, T). adj_w: (N, N) with adj_w[i, j] = weight of edge i->j.
    adj_mask: (N, N) bool, True where an edge exists.  Returns (B, C, N, T).
    V_in / adp are accepted for signature parity but unused (as in the module)."""
    del V_in, adp
    B, C, N, T = V.shape
    F = B * C * T

    # Node-major, feature-on-lanes flatten (this *is* the module's permute(2,0,1,3)).
    x = jnp.transpose(V, (2, 0, 1, 3)).reshape(N, F)

    w3 = adj_w.astype(jnp.float32)[:, :, None]                          # (N, N, 1)
    p3 = jnp.where(adj_mask, 0.0, jnp.inf).astype(jnp.float32)[:, :, None]

    # Feature tiling: single full-width block for small F, 128-aligned big tiles
    # (padded tail) for large F.  No divisibility assert.
    if F <= max_tile_f:
        tile_f, F_pad = F, F
    else:
        tile_f = max_tile_f
        F_pad = ((F + tile_f - 1) // tile_f) * tile_f
    if F_pad != F:
        x = jnp.pad(x, ((0, 0), (0, F_pad - F)))

    grid = (F_pad // tile_f,)

    out = pl.pallas_call(
        _v_min_kernel,
        out_shape=jax.ShapeDtypeStruct((N, F_pad), V.dtype),
        grid_spec=pltpu.PrefetchScalarGridSpec(
            num_scalar_prefetch=0,
            grid=grid,
            in_specs=[
                pl.BlockSpec((N, tile_f), lambda fi: (0, fi)),   # features (tiled)
                pl.BlockSpec((N, N, 1), lambda fi: (0, 0, 0)),   # weights (resident)
                pl.BlockSpec((N, N, 1), lambda fi: (0, 0, 0)),   # edge mask (resident)
            ],
            out_specs=pl.BlockSpec((N, tile_f), lambda fi: (0, fi)),
        ),
        compiler_params=pltpu.CompilerParams(
            dimension_semantics=("parallel",),        # shardable across v7x TCs
            vmem_limit_bytes=32 * 1024 * 1024,        # explicit, fits v7x 64 MiB
        ),
    )(x, w3, p3)

    # Drop feature padding and undo the node-major layout (module's permute(1,2,0,3)).
    out = out[:, :F].reshape(N, B, C, T)
    return jnp.transpose(out, (1, 2, 0, 3))
    # TODO(synk): for very large graphs (N >> 128) additionally tile the
    # destination-node axis; zero-in-degree nodes yield +inf here (the test
    # graph guarantees in-degree >= 1 via self-loops).


def _reference(V, adj_w, adj_mask):
    # Pure-JAX dense reference of the DGL u_mul_e + min aggregation.
    Vp = jnp.transpose(V, (2, 0, 1, 3))                                  # (Ns, B, C, T)
    msg = Vp[:, None, ...] * adj_w[:, :, None, None, None]               # (Ns, Nd, B, C, T)
    msg = jnp.where(adj_mask[:, :, None, None, None], msg, jnp.inf)
    red = jnp.min(msg, axis=0)                                           # (Nd, B, C, T)
    return jnp.transpose(red, (1, 2, 0, 3))                              # (B, C, N, T)


if __name__ == "__main__":
    key = jax.random.PRNGKey(0)
    k1, k2, k3, k4, k5 = jax.random.split(key, 5)

    B, C, N, T = 2, 4, 16, 8          # batch=2, channels=4, nodes(spatial)=16, seq=8
    V = jax.random.normal(k1, (B, C, N, T), dtype=jnp.float32)
    V_in = jax.random.normal(k2, (B, C, N, T), dtype=jnp.float32)   # unused by forward
    adp = jax.random.normal(k3, (N, N), dtype=jnp.float32)          # unused by forward

    # Dense representation of the DGL graph: edge weights + adjacency mask.
    adj_w = jax.random.uniform(k4, (N, N), dtype=jnp.float32, minval=0.1, maxval=1.0)
    adj_mask = jax.random.bernoulli(k5, 0.35, (N, N))
    adj_mask = jnp.logical_or(adj_mask, jnp.eye(N, dtype=bool))     # in-degree >= 1

    out = v_min_forward(V, adj_w, adj_mask, V_in, adp)
    out = jax.block_until_ready(out)

    ref = _reference(V, adj_w, adj_mask)
    assert out.shape == (B, C, N, T)
    assert jnp.allclose(out, ref, atol=1e-5, rtol=1e-5), "mismatch vs reference"

    print("KERNEL_OK")
</pallas_src>

<mosaic_0001>
module attributes {stable_mosaic.version = 11 : i64} {
  func.func @_v_min_kernel(%arg0: i32, %arg1: memref<16x64xf32, #tpu.memory_space<vmem>>, %arg2: memref<16x16x1xf32, #tpu.memory_space<vmem>>, %arg3: memref<16x16x1xf32, #tpu.memory_space<vmem>>, %arg4: memref<16x64xf32, #tpu.memory_space<vmem>>) attributes {dimension_semantics = [#tpu.dimension_semantics<parallel>], iteration_bounds = array<i64: 1>, scalar_prefetch = 0 : i64, scratch_operands = 0 : i64, tpu.core_type = #tpu.core_type<tc>, window_params = [{transform_indices = @transform_0, window_bounds = array<i64: 16, 64>}, {pipeline_mode = #tpu.pipeline_mode<synchronous>, transform_indices = @transform_1, window_bounds = array<i64: 16, 16, 1>}, {pipeline_mode = #tpu.pipeline_mode<synchronous>, transform_indices = @transform_2, window_bounds = array<i64: 16, 16, 1>}, {transform_indices = @transform_3, window_bounds = array<i64: 16, 64>}]} {
    %cst = arith.constant 0x7F800000 : f32
    %0 = vector.broadcast %cst : f32 to vector<16x64xf32>
    %c0_i32 = arith.constant 0 : i32
    %1 = arith.index_cast %c0_i32 : i32 to index
    %c0 = arith.constant 0 : index
    %2 = vector.load %arg1[%1, %c0] : memref<16x64xf32, #tpu.memory_space<vmem>>, vector<1x64xf32>
    %3 = arith.index_cast %c0_i32 : i32 to index
    %c0_0 = arith.constant 0 : index
    %c0_1 = arith.constant 0 : index
    %4 = vector.load %arg2[%3, %c0_0, %c0_1] : memref<16x16x1xf32, #tpu.memory_space<vmem>>, vector<1x16x1xf32>
    %5 = vector.shape_cast %4 : vector<1x16x1xf32> to vector<16x1xf32>
    %6 = arith.index_cast %c0_i32 : i32 to index
    %c0_2 = arith.constant 0 : index
    %c0_3 = arith.constant 0 : index
    %7 = vector.load %arg3[%6, %c0_2, %c0_3] : memref<16x16x1xf32, #tpu.memory_space<vmem>>, vector<1x16x1xf32>
    %8 = vector.shape_cast %7 : vector<1x16x1xf32> to vector<16x1xf32>
    %9 = vector.broadcast %2 : vector<1x64xf32> to vector<16x64xf32>
    %10 = vector.broadcast %5 : vector<16x1xf32> to vector<16x64xf32>
    %11 = arith.mulf %9, %10 : vector<16x64xf32>
    %12 = vector.broadcast %8 : vector<16x1xf32> to vector<16x64xf32>
    %13 = arith.addf %11, %12 : vector<16x64xf32>
    %14 = arith.minimumf %0, %13 : vector<16x64xf32>
    %c1_i32 = arith.constant 1 : i32
    %15 = arith.index_cast %c1_i32 : i32 to index
    %c0_4 = arith.constant 0 : index
    %16 = vector.load %arg1[%15, %c0_4] : memref<16x64xf32, #tpu.memory_space<vmem>>, vector<1x64xf32>
    %17 = arith.index_cast %c1_i32 : i32 to index
    %c0_5 = arith.constant 0 : index
    %c0_6 = arith.constant 0 : index
    %18 = vector.load %arg2[%17, %c0_5, %c0_6] : memref<16x16x1xf32, #tpu.memory_space<vmem>>, vector<1x16x1xf32>
    %19 = vector.shape_cast %18 : vector<1x16x1xf32> to vector<16x1xf32>
    %20 = arith.index_cast %c1_i32 : i32 to index
    %c0_7 = arith.constant 0 : index
    %c0_8 = arith.constant 0 : index
    %21 = vector.load %arg3[%20, %c0_7, %c0_8] : memref<16x16x1xf32, #tpu.memory_space<vmem>>, vector<1x16x1xf32>
    %22 = vector.shape_cast %21 : vector<1x16x1xf32> to vector<16x1xf32>
    %23 = vector.broadcast %16 : vector<1x64xf32> to vector<16x64xf32>
    %24 = vector.broadcast %19 : vector<16x1xf32> to vector<16x64xf32>
    %25 = arith.mulf %23, %24 : vector<16x64xf32>
    %26 = vector.broadcast %22 : vector<16x1xf32> to vector<16x64xf32>
    %27 = arith.addf %25, %26 : vector<16x64xf32>
    %28 = arith.minimumf %14, %27 : vector<16x64xf32>
    %c2_i32 = arith.constant 2 : i32
    %29 = arith.index_cast %c2_i32 : i32 to index
    %c0_9 = arith.constant 0 : index
    %30 = vector.load %arg1[%29, %c0_9] : memref<16x64xf32, #tpu.memory_space<vmem>>, vector<1x64xf32>
    %31 = arith.index_cast %c2_i32 : i32 to index
    %c0_10 = arith.constant 0 : index
    %c0_11 = arith.constant 0 : index
    %32 = vector.load %arg2[%31, %c0_10, %c0_11] : memref<16x16x1xf32, #tpu.memory_space<vmem>>, vector<1x16x1xf32>
    %33 = vector.shape_cast %32 : vector<1x16x1xf32> to vector<16x1xf32>
    %34 = arith.index_cast %c2_i32 : i32 to index
    %c0_12 = arith.constant 0 : index
    %c0_13 = arith.constant 0 : index
    %35 = vector.load %arg3[%34, %c0_12, %c0_13] : memref<16x16x1xf32, #tpu.memory_space<vmem>>, vector<1x16x1xf32>
    %36 = vector.shape_cast %35 : vector<1x16x1xf32> to vector<16x1xf32>
    %37 = vector.broadcast %30 : vector<1x64xf32> to vector<16x64xf32>
    %38 = vector.broadcast %33 : vector<16x1xf32> to vector<16x64xf32>
    %39 = arith.mulf %37, %38 : vector<16x64xf32>
    %40 = vector.broadcast %36 : vector<16x1xf32> to vector<16x64xf32>
    %41 = arith.addf %39, %40 : vector<16x64xf32>
    %42 = arith.minimumf %28, %41 : vector<16x64xf32>
    %c3_i32 = arith.constant 3 : i32
    %43 = arith.index_cast %c3_i32 : i32 to index
    %c0_14 = arith.constant 0 : index
    %44 = vector.load %arg1[%43, %c0_14] : memref<16x64xf32, #tpu.memory_space<vmem>>, vector<1x64xf32>
    %45 = arith.index_cast %c3_i32 : i32 to index
    %c0_15 = arith.constant 0 : index
    %c0_16 = arith.constant 0 : index
    %46 = vector.load %arg2[%45, %c0_15, %c0_16] : memref<16x16x1xf32, #tpu.memory_space<vmem>>, vector<1x16x1xf32>
    %47 = vector.shape_cast %46 : vector<1x16x1xf32> to vector<16x1xf32>
    %48 = arith.index_cast %c3_i32 : i32 to index
    %c0_17 = arith.constant 0 : index
    %c0_18 = arith.constant 0 : index
    %49 = vector.load %arg3[%48, %c0_17, %c0_18] : memref<16x16x1xf32, #tpu.memory_space<vmem>>, vector<1x16x1xf32>
    %50 = vector.shape_cast %49 : vector<1x16x1xf32> to vector<16x1xf32>
    %51 = vector.broadcast %44 : vector<1x64xf32> to vector<16x64xf32>
    %52 = vector.broadcast %47 : vector<16x1xf32> to vector<16x64xf32>
    %53 = arith.mulf %51, %52 : vector<16x64xf32>
    %54 = vector.broadcast %50 : vector<16x1xf32> to vector<16x64xf32>
    %55 = arith.addf %53, %54 : vector<16x64xf32>
    %56 = arith.minimumf %42, %55 : vector<16x64xf32>
    %c4_i32 = arith.constant 4 : i32
    %57 = arith.index_cast %c4_i32 : i32 to index
    %c0_19 = arith.constant 0 : index
    %58 = vector.load %arg1[%57, %c0_19] : memref<16x64xf32, #tpu.memory_space<vmem>>, vector<1x64xf32>
    %59 = arith.index_cast %c4_i32 : i32 to index
    %c0_20 = arith.constant 0 : index
    %c0_21 = arith.constant 0 : index
    %60 = vector.load %arg2[%59, %c0_20, %c0_21] : memref<16x16x1xf32, #tpu.memory_space<vmem>>, vector<1x16x1xf32>
    %61 = vector.shape_cast %60 : vector<1x16x1xf32> to vector<16x1xf32>
    %62 = arith.index_cast %c4_i32 : i32 to index
    %c0_22 = arith.constant 0 : index
    %c0_23 = arith.constant 0 : index
    %63 = vector.load %arg3[%62, %c0_22, %c0_23] : memref<16x16x1xf32, #tpu.memory_space<vmem>>, vector<1x16x1xf32>
    %64 = vector.shape_cast %63 : vector<1x16x1xf32> to vector<16x1xf32>
    %65 = vector.broadcast %58 : vector<1x64xf32> to vector<16x64xf32>
    %66 = vector.broadcast %61 : vector<16x1xf32> to vector<16x64xf32>
    %67 = arith.mulf %65, %66 : vector<16x64xf32>
    %68 = vector.broadcast %64 : vector<16x1xf32> to vector<16x64xf32>
    %69 = arith.addf %67, %68 : vector<16x64xf32>
    %70 = arith.minimumf %56, %69 : vector<16x64xf32>
    %c5_i32 = arith.constant 5 : i32
    %71 = arith.index_cast %c5_i32 : i32 to index
    %c0_24 = arith.constant 0 : index
    %72 = vector.load %arg1[%71, %c0_24] : memref<16x64xf32, #tpu.memory_space<vmem>>, vector<1x64xf32>
    %73 = arith.index_cast %c5_i32 : i32 to index
    %c0_25 = arith.constant 0 : index
    %c0_26 = arith.constant 0 : index
    %74 = vector.load %arg2[%73, %c0_25, %c0_26] : memref<16x16x1xf32, #tpu.memory_space<vmem>>, vector<1x16x1xf32>
    %75 = vector.shape_cast %74 : vector<1x16x1xf32> to vector<16x1xf32>
    %76 = arith.index_cast %c5_i32 : i32 to index
    %c0_27 = arith.constant 0 : index
    %c0_28 = arith.constant 0 : index
    %77 = vector.load %arg3[%76, %c0_27, %c0_28] : memref<16x16x1xf32, #tpu.memory_space<vmem>>, vector<1x16x1xf32>
    %78 = vector.shape_cast %77 : vector<1x16x1xf32> to vector<16x1xf32>
    %79 = vector.broadcast %72 : vector<1x64xf32> to vector<16x64xf32>
    %80 = vector.broadcast %75 : vector<16x1xf32> to vector<16x64xf32>
    %81 = arith.mulf %79, %80 : vector<16x64xf32>
    %82 = vector.broadcast %78 : vector<16x1xf32> to vector<16x64xf32>
    %83 = arith.addf %81, %82 : vector<16x64xf32>
    %84 = arith.minimumf %70, %83 : vector<16x64xf32>
    %c6_i32 = arith.constant 6 : i32
    %85 = arith.index_cast %c6_i32 : i32 to index
    %c0_29 = arith.constant 0 : index
    %86 = vector.load %arg1[%85, %c0_29] : memref<16x64xf32, #tpu.memory_space<vmem>>, vector<1x64xf32>
    %87 = arith.index_cast %c6_i32 : i32 to index
    %c0_30 = arith.constant 0 : index
    %c0_31 = arith.constant 0 : index
    %88 = vector.load %arg2[%87, %c0_30, %c0_31] : memref<16x16x1xf32, #tpu.memory_space<vmem>>, vector<1x16x1xf32>
    %89 = vector.shape_cast %88 : vector<1x16x1xf32> to vector<16x1xf32>
    %90 = arith.index_cast %c6_i32 : i32 to index
    %c0_32 = arith.constant 0 : index
    %c0_33 = arith.constant 0 : index
    %91 = vector.load %arg3[%90, %c0_32, %c0_33] : memref<16x16x1xf32, #tpu.memory_space<vmem>>, vector<1x16x1xf32>
    %92 = vector.shape_cast %91 : vector<1x16x1xf32> to vector<16x1xf32>
    %93 = vector.broadcast %86 : vector<1x64xf32> to vector<16x64xf32>
    %94 = vector.broadcast %89 : vector<16x1xf32> to vector<16x64xf32>
    %95 = arith.mulf %93, %94 : vector<16x64xf32>
    %96 = vector.broadcast %92 : vector<16x1xf32> to vector<16x64xf32>
    %97 = arith.addf %95, %96 : vector<16x64xf32>
    %98 = arith.minimumf %84, %97 : vector<16x64xf32>
    %c7_i32 = arith.constant 7 : i32
    %99 = arith.index_cast %c7_i32 : i32 to index
    %c0_34 = arith.constant 0 : index
    %100 = vector.load %arg1[%99, %c0_34] : memref<16x64xf32, #tpu.memory_space<vmem>>, vector<1x64xf32>
    %101 = arith.index_cast %c7_i32 : i32 to index
    %c0_35 = arith.constant 0 : index
    %c0_36 = arith.constant 0 : index
    %102 = vector.load %arg2[%101, %c0_35, %c0_36] : memref<16x16x1xf32, #tpu.memory_space<vmem>>, vector<1x16x1xf32>
    %103 = vector.shape_cast %102 : vector<1x16x1xf32> to vector<16x1xf32>
    %104 = arith.index_cast %c7_i32 : i32 to index
    %c0_37 = arith.constant 0 : index
    %c0_38 = arith.constant 0 : index
    %105 = vector.load %arg3[%104, %c0_37, %c0_38] : memref<16x16x1xf32, #tpu.memory_space<vmem>>, vector<1x16x1xf32>
    %106 = vector.shape_cast %105 : vector<1x16x1xf32> to vector<16x1xf32>
    %107 = vector.broadcast %100 : vector<1x64xf32> to vector<16x64xf32>
    %108 = vector.broadcast %103 : vector<16x1xf32> to vector<16x64xf32>
    %109 = arith.mulf %107, %108 : vector<16x64xf32>
    %110 = vector.broadcast %106 : vector<16x1xf32> to vector<16x64xf32>
    %111 = arith.addf %109, %110 : vector<16x64xf32>
    %112 = arith.minimumf %98, %111 : vector<16x64xf32>
    %c8_i32 = arith.constant 8 : i32
    %113 = arith.index_cast %c8_i32 : i32 to index
    %c0_39 = arith.constant 0 : index
    %114 = vector.load %arg1[%113, %c0_39] : memref<16x64xf32, #tpu.memory_space<vmem>>, vector<1x64xf32>
    %115 = arith.index_cast %c8_i32 : i32 to index
    %c0_40 = arith.constant 0 : index
    %c0_41 = arith.constant 0 : index
    %116 = vector.load %arg2[%115, %c0_40, %c0_41] : memref<16x16x1xf32, #tpu.memory_space<vmem>>, vector<1x16x1xf32>
    %117 = vector.shape_cast %116 : vector<1x16x1xf32> to vector<16x1xf32>
    %118 = arith.index_cast %c8_i32 : i32 to index
    %c0_42 = arith.constant 0 : index
    %c0_43 = arith.constant 0 : index
    %119 = vector.load %arg3[%118, %c0_42, %c0_43] : memref<16x16x1xf32, #tpu.memory_space<vmem>>, vector<1x16x1xf32>
    %120 = vector.shape_cast %119 : vector<1x16x1xf32> to vector<16x1xf32>
    %121 = vector.broadcast %114 : vector<1x64xf32> to vector<16x64xf32>
    %122 = vector.broadcast %117 : vector<16x1xf32> to vector<16x64xf32>
    %123 = arith.mulf %121, %122 : vector<16x64xf32>
    %124 = vector.broadcast %120 : vector<16x1xf32> to vector<16x64xf32>
    %125 = arith.addf %123, %124 : vector<16x64xf32>
    %126 = arith.minimumf %112, %125 : vector<16x64xf32>
    %c9_i32 = arith.constant 9 : i32
    %127 = arith.index_cast %c9_i32 : i32 to index
    %c0_44 = arith.constant 0 : index
    %128 = vector.load %arg1[%127, %c0_44] : memref<16x64xf32, #tpu.memory_space<vmem>>, vector<1x64xf32>
    %129 = arith.index_cast %c9_i32 : i32 to index
    %c0_45 = arith.constant 0 : index
    %c0_46 = arith.constant 0 : index
    %130 = vector.load %arg2[%129, %c0_45, %c0_46] : memref<16x16x1xf32, #tpu.memory_space<vmem>>, vector<1x16x1xf32>
    %131 = vector.shape_cast %130 : vector<1x16x1xf32> to vector<16x1xf32>
    %132 = arith.index_cast %c9_i32 : i32 to index
    %c0_47 = arith.constant 0 : index
    %c0_48 = arith.constant 0 : index
    %133 = vector.load %arg3[%132, %c0_47, %c0_48] : memref<16x16x1xf32, #tpu.memory_space<vmem>>, vector<1x16x1xf32>
    %134 = vector.shape_cast %133 : vector<1x16x1xf32> to vector<16x1xf32>
    %135 = vector.broadcast %128 : vector<1x64xf32> to vector<16x64xf32>
    %136 = vector.broadcast %131 : vector<16x1xf32> to vector<16x64xf32>
    %137 = arith.mulf %135, %136 : vector<16x64xf32>
    %138 = vector.broadcast %134 : vector<16x1xf32> to vector<16x64xf32>
    %139 = arith.addf %137, %138 : vector<16x64xf32>
    %140 = arith.minimumf %126, %139 : vector<16x64xf32>
    %c10_i32 = arith.constant 10 : i32
    %141 = arith.index_cast %c10_i32 : i32 to index
    %c0_49 = arith.constant 0 : index
    %142 = vector.load %arg1[%141, %c0_49] : memref<16x64xf32, #tpu.memory_space<vmem>>, vector<1x64xf32>
    %143 = arith.index_cast %c10_i32 : i32 to index
    %c0_50 = arith.constant 0 : index
    %c0_51 = arith.constant 0 : index
    %144 = vector.load %arg2[%143, %c0_50, %c0_51] : memref<16x16x1xf32, #tpu.memory_space<vmem>>, vector<1x16x1xf32>
    %145 = vector.shape_cast %144 : vector<1x16x1xf32> to vector<16x1xf32>
    %146 = arith.index_cast %c10_i32 : i32 to index
    %c0_52 = arith.constant 0 : index
    %c0_53 = arith.constant 0 : index
    %147 = vector.load %arg3[%146, %c0_52, %c0_53] : memref<16x16x1xf32, #tpu.memory_space<vmem>>, vector<1x16x1xf32>
    %148 = vector.shape_cast %147 : vector<1x16x1xf32> to vector<16x1xf32>
    %149 = vector.broadcast %142 : vector<1x64xf32> to vector<16x64xf32>
    %150 = vector.broadcast %145 : vector<16x1xf32> to vector<16x64xf32>
    %151 = arith.mulf %149, %150 : vector<16x64xf32>
    %152 = vector.broadcast %148 : vector<16x1xf32> to vector<16x64xf32>
    %153 = arith.addf %151, %152 : vector<16x64xf32>
    %154 = arith.minimumf %140, %153 : vector<16x64xf32>
    %c11_i32 = arith.constant 11 : i32
    %155 = arith.index_cast %c11_i32 : i32 to index
    %c0_54 = arith.constant 0 : index
    %156 = vector.load %arg1[%155, %c0_54] : memref<16x64xf32, #tpu.memory_space<vmem>>, vector<1x64xf32>
    %157 = arith.index_cast %c11_i32 : i32 to index
    %c0_55 = arith.constant 0 : index
    %c0_56 = arith.constant 0 : index
    %158 = vector.load %arg2[%157, %c0_55, %c0_56] : memref<16x16x1xf32, #tpu.memory_space<vmem>>, vector<1x16x1xf32>
    %159 = vector.shape_cast %158 : vector<1x16x1xf32> to vector<16x1xf32>
    %160 = arith.index_cast %c11_i32 : i32 to index
    %c0_57 = arith.constant 0 : index
    %c0_58 = arith.constant 0 : index
    %161 = vector.load %arg3[%160, %c0_57, %c0_58] : memref<16x16x1xf32, #tpu.memory_space<vmem>>, vector<1x16x1xf32>
    %162 = vector.shape_cast %161 : vector<1x16x1xf32> to vector<16x1xf32>
    %163 = vector.broadcast %156 : vector<1x64xf32> to vector<16x64xf32>
    %164 = vector.broadcast %159 : vector<16x1xf32> to vector<16x64xf32>
    %165 = arith.mulf %163, %164 : vector<16x64xf32>
    %166 = vector.broadcast %162 : vector<16x1xf32> to vector<16x64xf32>
    %167 = arith.addf %165, %166 : vector<16x64xf32>
    %168 = arith.minimumf %154, %167 : vector<16x64xf32>
    %c12_i32 = arith.constant 12 : i32
    %169 = arith.index_cast %c12_i32 : i32 to index
    %c0_59 = arith.constant 0 : index
    %170 = vector.load %arg1[%169, %c0_59] : memref<16x64xf32, #tpu.memory_space<vmem>>, vector<1x64xf32>
    %171 = arith.index_cast %c12_i32 : i32 to index
    %c0_60 = arith.constant 0 : index
    %c0_61 = arith.constant 0 : index
    %172 = vector.load %arg2[%171, %c0_60, %c0_61] : memref<16x16x1xf32, #tpu.memory_space<vmem>>, vector<1x16x1xf32>
    %173 = vector.shape_cast %172 : vector<1x16x1xf32> to vector<16x1xf32>
    %174 = arith.index_cast %c12_i32 : i32 to index
    %c0_62 = arith.constant 0 : index
    %c0_63 = arith.constant 0 : index
    %175 = vector.load %arg3[%174, %c0_62, %c0_63] : memref<16x16x1xf32, #tpu.memory_space<vmem>>, vector<1x16x1xf32>
    %176 = vector.shape_cast %175 : vector<1x16x1xf32> to vector<16x1xf32>
    %177 = vector.broadcast %170 : vector<1x64xf32> to vector<16x64xf32>
    %178 = vector.broadcast %173 : vector<16x1xf32> to vector<16x64xf32>
    %179 = arith.mulf %177, %178 : vector<16x64xf32>
    %180 = vector.broadcast %176 : vector<16x1xf32> to vector<16x64xf32>
    %181 = arith.addf %179, %180 : vector<16x64xf32>
    %182 = arith.minimumf %168, %181 : vector<16x64xf32>
    %c13_i32 = arith.constant 13 : i32
    %183 = arith.index_cast %c13_i32 : i32 to index
    %c0_64 = arith.constant 0 : index
    %184 = vector.load %arg1[%183, %c0_64] : memref<16x64xf32, #tpu.memory_space<vmem>>, vector<1x64xf32>
    %185 = arith.index_cast %c13_i32 : i32 to index
    %c0_65 = arith.constant 0 : index
    %c0_66 = arith.constant 0 : index
    %186 = vector.load %arg2[%185, %c0_65, %c0_66] : memref<16x16x1xf32, #tpu.memory_space<vmem>>, vector<1x16x1xf32>
    %187 = vector.shape_cast %186 : vector<1x16x1xf32> to vector<16x1xf32>
    %188 = arith.index_cast %c13_i32 : i32 to index
    %c0_67 = arith.constant 0 : index
    %c0_68 = arith.constant 0 : index
    %189 = vector.load %arg3[%188, %c0_67, %c0_68] : memref<16x16x1xf32, #tpu.memory_space<vmem>>, vector<1x16x1xf32>
    %190 = vector.shape_cast %189 : vector<1x16x1xf32> to vector<16x1xf32>
    %191 = vector.broadcast %184 : vector<1x64xf32> to vector<16x64xf32>
    %192 = vector.broadcast %187 : vector<16x1xf32> to vector<16x64xf32>
    %193 = arith.mulf %191, %192 : vector<16x64xf32>
    %194 = vector.broadcast %190 : vector<16x1xf32> to vector<16x64xf32>
    %195 = arith.addf %193, %194 : vector<16x64xf32>
    %196 = arith.minimumf %182, %195 : vector<16x64xf32>
    %c14_i32 = arith.constant 14 : i32
    %197 = arith.index_cast %c14_i32 : i32 to index
    %c0_69 = arith.constant 0 : index
    %198 = vector.load %arg1[%197, %c0_69] : memref<16x64xf32, #tpu.memory_space<vmem>>, vector<1x64xf32>
    %199 = arith.index_cast %c14_i32 : i32 to index
    %c0_70 = arith.constant 0 : index
    %c0_71 = arith.constant 0 : index
    %200 = vector.load %arg2[%199, %c0_70, %c0_71] : memref<16x16x1xf32, #tpu.memory_space<vmem>>, vector<1x16x1xf32>
    %201 = vector.shape_cast %200 : vector<1x16x1xf32> to vector<16x1xf32>
    %202 = arith.index_cast %c14_i32 : i32 to index
    %c0_72 = arith.constant 0 : index
    %c0_73 = arith.constant 0 : index
    %203 = vector.load %arg3[%202, %c0_72, %c0_73] : memref<16x16x1xf32, #tpu.memory_space<vmem>>, vector<1x16x1xf32>
    %204 = vector.shape_cast %203 : vector<1x16x1xf32> to vector<16x1xf32>
    %205 = vector.broadcast %198 : vector<1x64xf32> to vector<16x64xf32>
    %206 = vector.broadcast %201 : vector<16x1xf32> to vector<16x64xf32>
    %207 = arith.mulf %205, %206 : vector<16x64xf32>
    %208 = vector.broadcast %204 : vector<16x1xf32> to vector<16x64xf32>
    %209 = arith.addf %207, %208 : vector<16x64xf32>
    %210 = arith.minimumf %196, %209 : vector<16x64xf32>
    %c15_i32 = arith.constant 15 : i32
    %211 = arith.index_cast %c15_i32 : i32 to index
    %c0_74 = arith.constant 0 : index
    %212 = vector.load %arg1[%211, %c0_74] : memref<16x64xf32, #tpu.memory_space<vmem>>, vector<1x64xf32>
    %213 = arith.index_cast %c15_i32 : i32 to index
    %c0_75 = arith.constant 0 : index
    %c0_76 = arith.constant 0 : index
    %214 = vector.load %arg2[%213, %c0_75, %c0_76] : memref<16x16x1xf32, #tpu.memory_space<vmem>>, vector<1x16x1xf32>
    %215 = vector.shape_cast %214 : vector<1x16x1xf32> to vector<16x1xf32>
    %216 = arith.index_cast %c15_i32 : i32 to index
    %c0_77 = arith.constant 0 : index
    %c0_78 = arith.constant 0 : index
    %217 = vector.load %arg3[%216, %c0_77, %c0_78] : memref<16x16x1xf32, #tpu.memory_space<vmem>>, vector<1x16x1xf32>
    %218 = vector.shape_cast %217 : vector<1x16x1xf32> to vector<16x1xf32>
    %219 = vector.broadcast %212 : vector<1x64xf32> to vector<16x64xf32>
    %220 = vector.broadcast %215 : vector<16x1xf32> to vector<16x64xf32>
    %221 = arith.mulf %219, %220 : vector<16x64xf32>
    %222 = vector.broadcast %218 : vector<16x1xf32> to vector<16x64xf32>
    %223 = arith.addf %221, %222 : vector<16x64xf32>
    %224 = arith.minimumf %210, %223 : vector<16x64xf32>
    %c16_i32 = arith.constant 16 : i32
    %c0_79 = arith.constant 0 : index
    %c0_80 = arith.constant 0 : index
    %225 = vector.load %arg4[%c0_79, %c0_80] : memref<16x64xf32, #tpu.memory_space<vmem>>, vector<16x64xf32>
    tpu.vector_store %arg4[%c0_79, %c0_80], %224 {strides = array<i32>} : memref<16x64xf32, #tpu.memory_space<vmem>>, vector<16x64xf32>,
    return
  }
  func.func @transform_0(%arg0: i32) -> (i32, i32) {
    %c0_i32 = arith.constant 0 : i32
    %c0_i32_0 = arith.constant 0 : i32
    return %c0_i32, %arg0 : i32, i32
  }
  func.func @transform_1(%arg0: i32) -> (i32, i32, i32) {
    %c0_i32 = arith.constant 0 : i32
    %c0_i32_0 = arith.constant 0 : i32
    %c0_i32_1 = arith.constant 0 : i32
    %c0_i32_2 = arith.constant 0 : i32
    return %c0_i32, %c0_i32_0, %c0_i32_1 : i32, i32, i32
  }
  func.func @transform_2(%arg0: i32) -> (i32, i32, i32) {
    %c0_i32 = arith.constant 0 : i32
    %c0_i32_0 = arith.constant 0 : i32
    %c0_i32_1 = arith.constant 0 : i32
    %c0_i32_2 = arith.constant 0 : i32
    return %c0_i32, %c0_i32_0, %c0_i32_1 : i32, i32, i32
  }
  func.func @transform_3(%arg0: i32) -> (i32, i32) {
    %c0_i32 = arith.constant 0 : i32
    %c0_i32_0 = arith.constant 0 : i32
    return %c0_i32, %arg0 : i32, i32
  }
}

</mosaic_0001>

<llo_original>
// kernel: tpu_custom_call.1
$region0: #{tpu_custom_call.1}
  #allocation0 [shape = 'u32[]', space=smem, size = 0x4, offset = 0x4, fixed_abs, tag = 'smem constant byte address 0x4 - core index']
  #allocation1 [shape = 'u32[144,128]{1,0:T(1,128)}', space=vmem, size = 0x12000, scoped, tag = 'internal scratch']
  %s0 = inlined_call_operand.vmem [shape: f32[16,64], index: 0, kind: input, shape index: {}]
  %s1 = inlined_call_operand.vmem [shape: f32[16,16,1], index: 1, kind: input, shape index: {}]
  %s2 = inlined_call_operand.vmem [shape: f32[16,16,1], index: 2, kind: input, shape index: {}]
  %s3 = inlined_call_operand.hbm [shape: f32[16,64], index: 3, kind: output, shape index: {}]
  %s4 = sld [smem:[#allocation0]]
  $region22: #{tpu_custom_call.1} parent=0
    _
  %s6 = ssub.s32 1, %s4
  %s7 = scalar_select 0, %s6, %s4
  $region1: #{tpu_custom_call.1} parent=0
    #allocation2 [shape = 'u8[8192]{0}', space=vmem, size = 0x2000, scoped, tag = 'output window, operand 0, single buffered']
    #allocation3 [shape = 's32[1]{0}', space=sflag, size = 0x4, scoped, tag = 'scoped memory for tpu_custom_call.1']
    %8 = vsyncpa [#allocation3], 0
    // Predicated region
    $region2: #{tpu_custom_call.1} parent=1 // pred_check
      _
    $region3: #{tpu_custom_call.1} parent=1 // pred_check_branch
      %10 = sbr.rel (0) target = $region5
    $region4: #{tpu_custom_call.1} parent=1 // pred_region
      _
    $region5: #{tpu_custom_call.1} parent=1 // pred_fallthru
      _
    // Predicated region
    $region6: #{tpu_custom_call.1} parent=1 // pred_check
      _
    $region7: #{tpu_custom_call.1} parent=1 // pred_check_branch
      %12 = sbr.rel (0) target = $region9
    $region8: #{tpu_custom_call.1} parent=1 // pred_region
      _
    $region9: #{tpu_custom_call.1} parent=1 // pred_fallthru
      _
    // Predicated region
    $region10: #{tpu_custom_call.1} parent=1 // pred_check
      _
    $region11: #{tpu_custom_call.1} parent=1 // pred_check_branch
      %14 = sbr.rel (0) target = $region13
    $region12: #{tpu_custom_call.1} parent=1 // pred_region
      _
    $region13: #{tpu_custom_call.1} parent=1 // pred_fallthru
      _
    %v15 = vld [vmem:[%s0] sm:$0x1]
    %v16 = vld [vmem:[%s1] sm:$0xff]
    %v17 = vld [vmem:[%s1 + $0x8] sm:$0xff]
    %v18 = vld [vmem:[%s2] sm:$0xff]
    %v19 = vld [vmem:[%s2 + $0x8] sm:$0xff]
    %v20 = vlaneseq
    %v21 = vshrl.u32 %v20, 7
    %v22 = vsub.s32 0, %v21
    %v23 = vrot.slane %v15, %v22
    %25 = vset.pattern.permute.xlu0 0
    %26 = vperm.xlu0 %25, %v16
    %v27 = vpop.permute.xlu0 %26
    %30 = vset.pattern.permute.xlu0 0
    %31 = vperm.xlu0 %30, %v17
    %v32 = vpop.permute.xlu0 %31
    %v34 = vmul.f32 %v23, %v27
    %v35 = vmul.f32 %v23, %v32
    %37 = vset.pattern.permute.xlu0 0
    %38 = vperm.xlu0 %37, %v18
    %v39 = vpop.permute.xlu0 %38
    %42 = vset.pattern.permute.xlu0 0
    %43 = vperm.xlu0 %42, %v19
    %v44 = vpop.permute.xlu0 %43
    %v46 = vadd.f32 %v34, %v39
    %v47 = vadd.f32 %v35, %v44
    %v48 = vld [vmem:[%s0 + $0x1] sm:$0x1]
    %s49 = scalar_lea.vmem %s1, 16
    %v50 = vld [vmem:[%s49] sm:$0xff]
    %v51 = vld [vmem:[%s49 + $0x8] sm:$0xff]
    %s52 = scalar_lea.vmem %s2, 16
    %v53 = vld [vmem:[%s52] sm:$0xff]
    %v54 = vld [vmem:[%s52 + $0x8] sm:$0xff]
    %v55 = vlaneseq
    %v56 = vshrl.u32 %v55, 7
    %v57 = vsub.s32 0, %v56
    %v58 = vrot.slane %v48, %v57
    %60 = vset.pattern.permute.xlu0 0
    %61 = vperm.xlu0 %60, %v50
    %v62 = vpop.permute.xlu0 %61
    %65 = vset.pattern.permute.xlu0 0
    %66 = vperm.xlu0 %65, %v51
    %v67 = vpop.permute.xlu0 %66
    %v69 = vmul.f32 %v58, %v62
    %v70 = vmul.f32 %v58, %v67
    %72 = vset.pattern.permute.xlu0 0
    %73 = vperm.xlu0 %72, %v53
    %v74 = vpop.permute.xlu0 %73
    %77 = vset.pattern.permute.xlu0 0
    %78 = vperm.xlu0 %77, %v54
    %v79 = vpop.permute.xlu0 %78
    %v81 = vadd.f32 %v69, %v74
    %v82 = vadd.f32 %v70, %v79
    %v83 = vmin.f32 %v46, %v81
    %v84 = vmin.f32 %v47, %v82
    %v85 = vld [vmem:[%s0 + $0x2] sm:$0x1]
    %s86 = scalar_lea.vmem %s1, 32
    %v87 = vld [vmem:[%s86] sm:$0xff]
    %v88 = vld [vmem:[%s86 + $0x8] sm:$0xff]
    %s89 = scalar_lea.vmem %s2, 32
    %v90 = vld [vmem:[%s89] sm:$0xff]
    %v91 = vld [vmem:[%s89 + $0x8] sm:$0xff]
    %v92 = vlaneseq
    %v93 = vshrl.u32 %v92, 7
    %v94 = vsub.s32 0, %v93
    %v95 = vrot.slane %v85, %v94
    %97 = vset.pattern.permute.xlu0 0
    %98 = vperm.xlu0 %97, %v87
    %v99 = vpop.permute.xlu0 %98
    %102 = vset.pattern.permute.xlu0 0
    %103 = vperm.xlu0 %102, %v88
    %v104 = vpop.permute.xlu0 %103
    %v106 = vmul.f32 %v95, %v99
    %v107 = vmul.f32 %v95, %v104
    %109 = vset.pattern.permute.xlu0 0
    %110 = vperm.xlu0 %109, %v90
    %v111 = vpop.permute.xlu0 %110
    %114 = vset.pattern.permute.xlu0 0
    %115 = vperm.xlu0 %114, %v91
    %v116 = vpop.permute.xlu0 %115
    %v118 = vadd.f32 %v106, %v111
    %v119 = vadd.f32 %v107, %v116
    %v120 = vmin.f32 %v83, %v118
    %v121 = vmin.f32 %v84, %v119
    %v122 = vld [vmem:[%s0 + $0x3] sm:$0x1]
    %s123 = scalar_lea.vmem %s1, 48
    %v124 = vld [vmem:[%s123] sm:$0xff]
    %v125 = vld [vmem:[%s123 + $0x8] sm:$0xff]
    %s126 = scalar_lea.vmem %s2, 48
    %v127 = vld [vmem:[%s126] sm:$0xff]
    %v128 = vld [vmem:[%s126 + $0x8] sm:$0xff]
    %v129 = vlaneseq
    %v130 = vshrl.u32 %v129, 7
    %v131 = vsub.s32 0, %v130
    %v132 = vrot.slane %v122, %v131
    %134 = vset.pattern.permute.xlu0 0
    %135 = vperm.xlu0 %134, %v124
    %v136 = vpop.permute.xlu0 %135
    %139 = vset.pattern.permute.xlu0 0
    %140 = vperm.xlu0 %139, %v125
    %v141 = vpop.permute.xlu0 %140
    %v143 = vmul.f32 %v132, %v136
    %v144 = vmul.f32 %v132, %v141
    %146 = vset.pattern.permute.xlu0 0
    %147 = vperm.xlu0 %146, %v127
    %v148 = vpop.permute.xlu0 %147
    %151 = vset.pattern.permute.xlu0 0
    %152 = vperm.xlu0 %151, %v128
    %v153 = vpop.permute.xlu0 %152
    %v155 = vadd.f32 %v143, %v148
    %v156 = vadd.f32 %v144, %v153
    %v157 = vmin.f32 %v120, %v155
    %v158 = vmin.f32 %v121, %v156
    %v159 = vld [vmem:[%s0 + $0x4] sm:$0x1]
    %s160 = scalar_lea.vmem %s1, 64
    %v161 = vld [vmem:[%s160] sm:$0xff]
    %v162 = vld [vmem:[%s160 + $0x8] sm:$0xff]
    %s163 = scalar_lea.vmem %s2, 64
    %v164 = vld [vmem:[%s163] sm:$0xff]
    %v165 = vld [vmem:[%s163 + $0x8] sm:$0xff]
    %v166 = vlaneseq
    %v167 = vshrl.u32 %v166, 7
    %v168 = vsub.s32 0, %v167
    %v169 = vrot.slane %v159, %v168
    %171 = vset.pattern.permute.xlu0 0
    %172 = vperm.xlu0 %171, %v161
    %v173 = vpop.permute.xlu0 %172
    %176 = vset.pattern.permute.xlu0 0
    %177 = vperm.xlu0 %176, %v162
    %v178 = vpop.permute.xlu0 %177
    %v180 = vmul.f32 %v169, %v173
    %v181 = vmul.f32 %v169, %v178
    %183 = vset.pattern.permute.xlu0 0
    %184 = vperm.xlu0 %183, %v164
    %v185 = vpop.permute.xlu0 %184
    %188 = vset.pattern.permute.xlu0 0
    %189 = vperm.xlu0 %188, %v165
    %v190 = vpop.permute.xlu0 %189
    %v192 = vadd.f32 %v180, %v185
    %v193 = vadd.f32 %v181, %v190
    %v194 = vmin.f32 %v157, %v192
    %v195 = vmin.f32 %v158, %v193
    %v196 = vld [vmem:[%s0 + $0x5] sm:$0x1]
    %s197 = scalar_lea.vmem %s1, 80
    %v198 = vld [vmem:[%s197] sm:$0xff]
    %v199 = vld [vmem:[%s197 + $0x8] sm:$0xff]
    %s200 = scalar_lea.vmem %s2, 80
    %v201 = vld [vmem:[%s200] sm:$0xff]
    %v202 = vld [vmem:[%s200 + $0x8] sm:$0xff]
    %v203 = vlaneseq
    %v204 = vshrl.u32 %v203, 7
    %v205 = vsub.s32 0, %v204
    %v206 = vrot.slane %v196, %v205
    %208 = vset.pattern.permute.xlu0 0
    %209 = vperm.xlu0 %208, %v198
    %v210 = vpop.permute.xlu0 %209
    %213 = vset.pattern.permute.xlu0 0
    %214 = vperm.xlu0 %213, %v199
    %v215 = vpop.permute.xlu0 %214
    %v217 = vmul.f32 %v206, %v210
    %v218 = vmul.f32 %v206, %v215
    %220 = vset.pattern.permute.xlu0 0
    %221 = vperm.xlu0 %220, %v201
    %v222 = vpop.permute.xlu0 %221
    %225 = vset.pattern.permute.xlu0 0
    %226 = vperm.xlu0 %225, %v202
    %v227 = vpop.permute.xlu0 %226
    %v229 = vadd.f32 %v217, %v222
    %v230 = vadd.f32 %v218, %v227
    %v231 = vmin.f32 %v194, %v229
    %v232 = vmin.f32 %v195, %v230
    %v233 = vld [vmem:[%s0 + $0x6] sm:$0x1]
    %s234 = scalar_lea.vmem %s1, 96
    %v235 = vld [vmem:[%s234] sm:$0xff]
    %v236 = vld [vmem:[%s234 + $0x8] sm:$0xff]
    %s237 = scalar_lea.vmem %s2, 96
    %v238 = vld [vmem:[%s237] sm:$0xff]
    %v239 = vld [vmem:[%s237 + $0x8] sm:$0xff]
    %v240 = vlaneseq
    %v241 = vshrl.u32 %v240, 7
    %v242 = vsub.s32 0, %v241
    %v243 = vrot.slane %v233, %v242
    %245 = vset.pattern.permute.xlu0 0
    %246 = vperm.xlu0 %245, %v235
    %v247 = vpop.permute.xlu0 %246
    %250 = vset.pattern.permute.xlu0 0
    %251 = vperm.xlu0 %250, %v236
    %v252 = vpop.permute.xlu0 %251
    %v254 = vmul.f32 %v243, %v247
    %v255 = vmul.f32 %v243, %v252
    %257 = vset.pattern.permute.xlu0 0
    %258 = vperm.xlu0 %257, %v238
    %v259 = vpop.permute.xlu0 %258
    %262 = vset.pattern.permute.xlu0 0
    %263 = vperm.xlu0 %262, %v239
    %v264 = vpop.permute.xlu0 %263
    %v266 = vadd.f32 %v254, %v259
    %v267 = vadd.f32 %v255, %v264
    %v268 = vmin.f32 %v231, %v266
    %v269 = vmin.f32 %v232, %v267
    %v270 = vld [vmem:[%s0 + $0x7] sm:$0x1]
    %s271 = scalar_lea.vmem %s1, 112
    %v272 = vld [vmem:[%s271] sm:$0xff]
    %v273 = vld [vmem:[%s271 + $0x8] sm:$0xff]
    %s274 = scalar_lea.vmem %s2, 112
    %v275 = vld [vmem:[%s274] sm:$0xff]
    %v276 = vld [vmem:[%s274 + $0x8] sm:$0xff]
    %v277 = vlaneseq
    %v278 = vshrl.u32 %v277, 7
    %v279 = vsub.s32 0, %v278
    %v280 = vrot.slane %v270, %v279
    %282 = vset.pattern.permute.xlu0 0
    %283 = vperm.xlu0 %282, %v272
    %v284 = vpop.permute.xlu0 %283
    %287 = vset.pattern.permute.xlu0 0
    %288 = vperm.xlu0 %287, %v273
    %v289 = vpop.permute.xlu0 %288
    %v291 = vmul.f32 %v280, %v284
    %v292 = vmul.f32 %v280, %v289
    %294 = vset.pattern.permute.xlu0 0
    %295 = vperm.xlu0 %294, %v275
    %v296 = vpop.permute.xlu0 %295
    %299 = vset.pattern.permute.xlu0 0
    %300 = vperm.xlu0 %299, %v276
    %v301 = vpop.permute.xlu0 %300
    %v303 = vadd.f32 %v291, %v296
    %v304 = vadd.f32 %v292, %v301
    %v305 = vmin.f32 %v268, %v303
    %v306 = vmin.f32 %v269, %v304
    %v307 = vld [vmem:[%s0 + $0x8] sm:$0x1]
    %s308 = scalar_lea.vmem %s1, 128
    %v309 = vld [vmem:[%s308] sm:$0xff]
    %v310 = vld [vmem:[%s308 + $0x8] sm:$0xff]
    %s311 = scalar_lea.vmem %s2, 128
    %v312 = vld [vmem:[%s311] sm:$0xff]
    %v313 = vld [vmem:[%s311 + $0x8] sm:$0xff]
    %v314 = vlaneseq
    %v315 = vshrl.u32 %v314, 7
    %v316 = vsub.s32 0, %v315
    %v317 = vrot.slane %v307, %v316
    %319 = vset.pattern.permute.xlu0 0
    %320 = vperm.xlu0 %319, %v309
    %v321 = vpop.permute.xlu0 %320
    %324 = vset.pattern.permute.xlu0 0
    %325 = vperm.xlu0 %324, %v310
    %v326 = vpop.permute.xlu0 %325
    %v328 = vmul.f32 %v317, %v321
    %v329 = vmul.f32 %v317, %v326
    %331 = vset.pattern.permute.xlu0 0
    %332 = vperm.xlu0 %331, %v312
    %v333 = vpop.permute.xlu0 %332
    %336 = vset.pattern.permute.xlu0 0
    %337 = vperm.xlu0 %336, %v313
    %v338 = vpop.permute.xlu0 %337
    %v340 = vadd.f32 %v328, %v333
    %v341 = vadd.f32 %v329, %v338
    %v342 = vmin.f32 %v305, %v340
    %v343 = vmin.f32 %v306, %v341
    %v344 = vld [vmem:[%s0 + $0x9] sm:$0x1]
    %s345 = scalar_lea.vmem %s1, 144
    %v346 = vld [vmem:[%s345] sm:$0xff]
    %v347 = vld [vmem:[%s345 + $0x8] sm:$0xff]
    %s348 = scalar_lea.vmem %s2, 144
    %v349 = vld [vmem:[%s348] sm:$0xff]
    %v350 = vld [vmem:[%s348 + $0x8] sm:$0xff]
    %v351 = vlaneseq
    %v352 = vshrl.u32 %v351, 7
    %v353 = vsub.s32 0, %v352
    %v354 = vrot.slane %v344, %v353
    %356 = vset.pattern.permute.xlu0 0
    %357 = vperm.xlu0 %356, %v346
    %v358 = vpop.permute.xlu0 %357
    %361 = vset.pattern.permute.xlu0 0
    %362 = vperm.xlu0 %361, %v347
    %v363 = vpop.permute.xlu0 %362
    %v365 = vmul.f32 %v354, %v358
    %v366 = vmul.f32 %v354, %v363
    %368 = vset.pattern.permute.xlu0 0
    %369 = vperm.xlu0 %368, %v349
    %v370 = vpop.permute.xlu0 %369
    %373 = vset.pattern.permute.xlu0 0
    %374 = vperm.xlu0 %373, %v350
    %v375 = vpop.permute.xlu0 %374
    %v377 = vadd.f32 %v365, %v370
    %v378 = vadd.f32 %v366, %v375
    %v379 = vmin.f32 %v342, %v377
    %v380 = vmin.f32 %v343, %v378
    %v381 = vld [vmem:[%s0 + $0xa] sm:$0x1]
    %s382 = scalar_lea.vmem %s1, 160
    %v383 = vld [vmem:[%s382] sm:$0xff]
    %v384 = vld [vmem:[%s382 + $0x8] sm:$0xff]
    %s385 = scalar_lea.vmem %s2, 160
    %v386 = vld [vmem:[%s385] sm:$0xff]
    %v387 = vld [vmem:[%s385 + $0x8] sm:$0xff]
    %v388 = vlaneseq
    %v389 = vshrl.u32 %v388, 7
    %v390 = vsub.s32 0, %v389
    %v391 = vrot.slane %v381, %v390
    %393 = vset.pattern.permute.xlu0 0
    %394 = vperm.xlu0 %393, %v383
    %v395 = vpop.permute.xlu0 %394
    %398 = vset.pattern.permute.xlu0 0
    %399 = vperm.xlu0 %398, %v384
    %v400 = vpop.permute.xlu0 %399
    %v402 = vmul.f32 %v391, %v395
    %v403 = vmul.f32 %v391, %v400
    %405 = vset.pattern.permute.xlu0 0
    %406 = vperm.xlu0 %405, %v386
    %v407 = vpop.permute.xlu0 %406
    %410 = vset.pattern.permute.xlu0 0
    %411 = vperm.xlu0 %410, %v387
    %v412 = vpop.permute.xlu0 %411
    %v414 = vadd.f32 %v402, %v407
    %v415 = vadd.f32 %v403, %v412
    %v416 = vmin.f32 %v379, %v414
    %v417 = vmin.f32 %v380, %v415
    %v418 = vld [vmem:[%s0 + $0xb] sm:$0x1]
    %s419 = scalar_lea.vmem %s1, 176
    %v420 = vld [vmem:[%s419] sm:$0xff]
    %v421 = vld [vmem:[%s419 + $0x8] sm:$0xff]
    %s422 = scalar_lea.vmem %s2, 176
    %v423 = vld [vmem:[%s422] sm:$0xff]
    %v424 = vld [vmem:[%s422 + $0x8] sm:$0xff]
    %v425 = vlaneseq
    %v426 = vshrl.u32 %v425, 7
    %v427 = vsub.s32 0, %v426
    %v428 = vrot.slane %v418, %v427
    %430 = vset.pattern.permute.xlu0 0
    %431 = vperm.xlu0 %430, %v420
    %v432 = vpop.permute.xlu0 %431
    %435 = vset.pattern.permute.xlu0 0
    %436 = vperm.xlu0 %435, %v421
    %v437 = vpop.permute.xlu0 %436
    %v439 = vmul.f32 %v428, %v432
    %v440 = vmul.f32 %v428, %v437
    %442 = vset.pattern.permute.xlu0 0
    %443 = vperm.xlu0 %442, %v423
    %v444 = vpop.permute.xlu0 %443
    %447 = vset.pattern.permute.xlu0 0
    %448 = vperm.xlu0 %447, %v424
    %v449 = vpop.permute.xlu0 %448
    %v451 = vadd.f32 %v439, %v444
    %v452 = vadd.f32 %v440, %v449
    %v453 = vmin.f32 %v416, %v451
    %v454 = vmin.f32 %v417, %v452
    %v455 = vld [vmem:[%s0 + $0xc] sm:$0x1]
    %s456 = scalar_lea.vmem %s1, 192
    %v457 = vld [vmem:[%s456] sm:$0xff]
    %v458 = vld [vmem:[%s456 + $0x8] sm:$0xff]
    %s459 = scalar_lea.vmem %s2, 192
    %v460 = vld [vmem:[%s459] sm:$0xff]
    %v461 = vld [vmem:[%s459 + $0x8] sm:$0xff]
    %v462 = vlaneseq
    %v463 = vshrl.u32 %v462, 7
    %v464 = vsub.s32 0, %v463
    %v465 = vrot.slane %v455, %v464
    %467 = vset.pattern.permute.xlu0 0
    %468 = vperm.xlu0 %467, %v457
    %v469 = vpop.permute.xlu0 %468
    %472 = vset.pattern.permute.xlu0 0
    %473 = vperm.xlu0 %472, %v458
    %v474 = vpop.permute.xlu0 %473
    %v476 = vmul.f32 %v465, %v469
    %v477 = vmul.f32 %v465, %v474
    %479 = vset.pattern.permute.xlu0 0
    %480 = vperm.xlu0 %479, %v460
    %v481 = vpop.permute.xlu0 %480
    %484 = vset.pattern.permute.xlu0 0
    %485 = vperm.xlu0 %484, %v461
    %v486 = vpop.permute.xlu0 %485
    %v488 = vadd.f32 %v476, %v481
    %v489 = vadd.f32 %v477, %v486
    %v490 = vmin.f32 %v453, %v488
    %v491 = vmin.f32 %v454, %v489
    %v492 = vld [vmem:[%s0 + $0xd] sm:$0x1]
    %s493 = scalar_lea.vmem %s1, 208
    %v494 = vld [vmem:[%s493] sm:$0xff]
    %v495 = vld [vmem:[%s493 + $0x8] sm:$0xff]
    %s496 = scalar_lea.vmem %s2, 208
    %v497 = vld [vmem:[%s496] sm:$0xff]
    %v498 = vld [vmem:[%s496 + $0x8] sm:$0xff]
    %v499 = vlaneseq
    %v500 = vshrl.u32 %v499, 7
    %v501 = vsub.s32 0, %v500
    %v502 = vrot.slane %v492, %v501
    %504 = vset.pattern.permute.xlu0 0
    %505 = vperm.xlu0 %504, %v494
    %v506 = vpop.permute.xlu0 %505
    %509 = vset.pattern.permute.xlu0 0
    %510 = vperm.xlu0 %509, %v495
    %v511 = vpop.permute.xlu0 %510
    %v513 = vmul.f32 %v502, %v506
    %v514 = vmul.f32 %v502, %v511
    %516 = vset.pattern.permute.xlu0 0
    %517 = vperm.xlu0 %516, %v497
    %v518 = vpop.permute.xlu0 %517
    %521 = vset.pattern.permute.xlu0 0
    %522 = vperm.xlu0 %521, %v498
    %v523 = vpop.permute.xlu0 %522
    %v525 = vadd.f32 %v513, %v518
    %v526 = vadd.f32 %v514, %v523
    %v527 = vmin.f32 %v490, %v525
    %v528 = vmin.f32 %v491, %v526
    %v529 = vld [vmem:[%s0 + $0xe] sm:$0x1]
    %s530 = scalar_lea.vmem %s1, 224
    %v531 = vld [vmem:[%s530] sm:$0xff]
    %v532 = vld [vmem:[%s530 + $0x8] sm:$0xff]
    %s533 = scalar_lea.vmem %s2, 224
    %v534 = vld [vmem:[%s533] sm:$0xff]
    %v535 = vld [vmem:[%s533 + $0x8] sm:$0xff]
    %v536 = vlaneseq
    %v537 = vshrl.u32 %v536, 7
    %v538 = vsub.s32 0, %v537
    %v539 = vrot.slane %v529, %v538
    %541 = vset.pattern.permute.xlu0 0
    %542 = vperm.xlu0 %541, %v531
    %v543 = vpop.permute.xlu0 %542
    %546 = vset.pattern.permute.xlu0 0
    %547 = vperm.xlu0 %546, %v532
    %v548 = vpop.permute.xlu0 %547
    %v550 = vmul.f32 %v539, %v543
    %v551 = vmul.f32 %v539, %v548
    %553 = vset.pattern.permute.xlu0 0
    %554 = vperm.xlu0 %553, %v534
    %v555 = vpop.permute.xlu0 %554
    %558 = vset.pattern.permute.xlu0 0
    %559 = vperm.xlu0 %558, %v535
    %v560 = vpop.permute.xlu0 %559
    %v562 = vadd.f32 %v550, %v555
    %v563 = vadd.f32 %v551, %v560
    %v564 = vmin.f32 %v527, %v562
    %v565 = vmin.f32 %v528, %v563
    %v566 = vld [vmem:[%s0 + $0xf] sm:$0x1]
    %s567 = scalar_lea.vmem %s1, 240
    %v568 = vld [vmem:[%s567] sm:$0xff]
    %v569 = vld [vmem:[%s567 + $0x8] sm:$0xff]
    %s570 = scalar_lea.vmem %s2, 240
    %v571 = vld [vmem:[%s570] sm:$0xff]
    %v572 = vld [vmem:[%s570 + $0x8] sm:$0xff]
    %v573 = vlaneseq
    %v574 = vshrl.u32 %v573, 7
    %v575 = vsub.s32 0, %v574
    %v576 = vrot.slane %v566, %v575
    %578 = vset.pattern.permute.xlu0 0
    %579 = vperm.xlu0 %578, %v568
    %v580 = vpop.permute.xlu0 %579
    %583 = vset.pattern.permute.xlu0 0
    %584 = vperm.xlu0 %583, %v569
    %v585 = vpop.permute.xlu0 %584
    %v587 = vmul.f32 %v576, %v580
    %v588 = vmul.f32 %v576, %v585
    %590 = vset.pattern.permute.xlu0 0
    %591 = vperm.xlu0 %590, %v571
    %v592 = vpop.permute.xlu0 %591
    %595 = vset.pattern.permute.xlu0 0
    %596 = vperm.xlu0 %595, %v572
    %v597 = vpop.permute.xlu0 %596
    %v599 = vadd.f32 %v587, %v592
    %v600 = vadd.f32 %v588, %v597
    %v601 = vmin.f32 %v564, %v599
    %v602 = vmin.f32 %v565, %v600
    %vm603 = vcmask 523264
    %604 = vst.msk [vmem:[#allocation2] sm:$0xff] %vm603, %v601
    %605 = vst.msk [vmem:[#allocation2 + $0x8] sm:$0xff] %vm603, %v602
    // Predicated region
    $region14: #{tpu_custom_call.1} parent=1 // pred_check
      _
    $region15: #{tpu_custom_call.1} parent=1 // pred_check_branch
      %607 = sbr.rel (0) target = $region17
    $region16: #{tpu_custom_call.1} parent=1 // pred_region
      %s609 = ssub.s32 256, 256
      %610 = vsyncadd [#allocation3], %s609
      %s611 = sshll.u32 [#allocation2], 4
      %s612 = int_to_ptr.vmem [resolvable:$true] %s611
      %617 = dma.vmem_to_hbm [thread:$0]  %s612, 256, %s3, [#allocation3], 128, 128, 8
    $region17: #{tpu_custom_call.1} parent=1 // pred_fallthru
      _
    // Predicated region
    $region18: #{tpu_custom_call.1} parent=1 // pred_check
      _
    $region19: #{tpu_custom_call.1} parent=1 // pred_check_branch
      %619 = sbr.rel (0) target = $region21
    $region20: #{tpu_custom_call.1} parent=1 // pred_region
      %620 = dma.done [#allocation3], 256
    $region21: #{tpu_custom_call.1} parent=1 // pred_fallthru
      _
    %621 = vsyncpa [#allocation3], 1

</llo_original>
